<compile_context>
chip_gen: v7x
topology: tpu7x:2x2x1
jax: 0.10.0
libtpu: 0.0.40
codegen_flags: <defaults>
</compile_context>

<pallas_src>
import jax
import jax.numpy as jnp
from jax.experimental import pallas as pl
from jax.experimental.pallas import tpu as pltpu


_LANES = 1024                       # preferred lane-dense last dim of the slab
_TARGET_BLOCK_BYTES = 4 << 20       # ~4 MiB per output block


def _make_kernel(apply_abs):
    """Kernel closure; `apply_abs` is a trace-time Python bool (beta override or not)."""

    def kernel(scal_ref, sdf_ref, out_ref):
        # scal_ref: SMEM f32[2] = [beta_raw, beta_min] (beta_min==0 on override).
        b0 = scal_ref[0]
        b1 = scal_ref[1]
        beta_eff = (jnp.abs(b0) + b1) if apply_abs else (b0 + b1)
        inv_beta = 1.0 / beta_eff          # scalar path; free (idle scalar slots)
        half_inv = 0.5 * inv_beta

        x = sdf_ref[...].astype(jnp.float32)      # in-vreg cast (VPU slack)
        e = jnp.exp(-jnp.abs(x) * inv_beta)       # single EUP transcendental
        dens = jnp.where(x >= 0.0, half_inv * e, inv_beta - half_inv * e)
        out_ref[...] = dens.astype(out_ref.dtype)

    return kernel


def _sublane_multiple(*dtypes):
    """Native sublane packing multiple: 8 (4B), 16 (2B), 32 (1B)."""
    m = 8
    for dt in dtypes:
        itemsize = jnp.dtype(dt).itemsize
        m = max(m, 32 // max(itemsize, 1))
    return m


def _pick_tile_rows(rows, cols, sub, out_itemsize):
    """Largest row-tile (multiple of `sub`) giving ~4 MiB output blocks."""
    if rows <= sub:
        return rows                        # full-extent block on the sublane dim
    bytes_per_row = max(cols * out_itemsize, 1)
    tr = (_TARGET_BLOCK_BYTES // bytes_per_row) // sub * sub
    tr = max(sub, tr)
    if tr >= rows:
        return rows                        # whole array in one block
    return tr


def _as_slab(sdf, lanes=_LANES):
    """Free reshape to a 2-D slab; never pads or slices (no extra HBM traffic)."""
    shape = sdf.shape
    total = sdf.size
    if total % lanes == 0:
        return jnp.reshape(sdf, (total // lanes, lanes))
    if len(shape) >= 1 and shape[-1] > 0 and shape[-1] % 128 == 0:
        return jnp.reshape(sdf, (-1, shape[-1]))
    if total % 128 == 0:
        return jnp.reshape(sdf, (total // 128, 128))
    # Ragged: keep the original last dim as a full-extent lane block (allowed by
    # the (8,128) rule); Pallas masks the partial stores instead of us padding.
    if len(shape) >= 2:
        return jnp.reshape(sdf, (-1, shape[-1]))
    return jnp.reshape(sdf, (1, total))


def laplace_density(sdf, beta_param, beta=None, beta_min=1e-4):
    """Pallas wrapper mirroring Density.forward(sdf, beta=None)."""
    orig_shape = sdf.shape
    in_dtype = sdf.dtype
    # PyTorch promotes against the fp32 beta Parameter -> emit float32.
    out_dtype = jnp.promote_types(in_dtype, jnp.float32)

    if sdf.size == 0:
        return jnp.zeros(orig_shape, out_dtype)

    apply_abs = beta is None
    if apply_abs:
        scal = jnp.stack([jnp.asarray(beta_param, jnp.float32).reshape(()),
                          jnp.asarray(beta_min, jnp.float32).reshape(())])
    else:
        scal = jnp.stack([jnp.asarray(beta, jnp.float32).reshape(()),
                          jnp.zeros((), jnp.float32)])

    slab = _as_slab(sdf)
    rows, cols = slab.shape
    sub = _sublane_multiple(in_dtype, out_dtype)
    tile_rows = _pick_tile_rows(rows, cols, sub, jnp.dtype(out_dtype).itemsize)
    grid = pl.cdiv(rows, tile_rows)

    out = pl.pallas_call(
        _make_kernel(apply_abs),
        out_shape=jax.ShapeDtypeStruct((rows, cols), out_dtype),
        grid_spec=pltpu.PrefetchScalarGridSpec(
            num_scalar_prefetch=0,
            grid=(grid,),
            in_specs=[
                pl.BlockSpec(memory_space=pltpu.SMEM),               # [beta, beta_min]
                pl.BlockSpec((tile_rows, cols), lambda i: (i, 0)),   # sdf tile
            ],
            out_specs=pl.BlockSpec((tile_rows, cols), lambda i: (i, 0)),
        ),
        compiler_params=pltpu.CompilerParams(
            # Single axis, sharded across TCs where the chip has two (v7x).
            dimension_semantics=("parallel",),
            # ~16 MiB of double-buffered in+out; raise the scoped limit so the
            # same 4 MiB tile also works under v5e's smaller default.
            vmem_limit_bytes=48 * 1024 * 1024,
        ),
    )(scal, slab)

    return jnp.reshape(out, orig_shape)


def _reference(sdf, beta_param, beta_min):
    b = jnp.abs(jnp.asarray(beta_param, jnp.float32)) + beta_min
    x = sdf.astype(jnp.float32)
    return (1.0 / b) * (0.5 + 0.5 * jnp.sign(x) * jnp.expm1(-jnp.abs(x) / b))


if __name__ == "__main__":
    key = jax.random.PRNGKey(0)

    # Deterministic "checkpoint": params_init = {"beta": 0.1}
    beta_param = jnp.asarray(0.1, jnp.float32)
    beta_min = 1e-4

    # 128 rays x 128 samples -> (16, 1024) lane-dense slab, single wide block.
    sdf = jax.random.normal(key, (128, 128), dtype=jnp.float32) * 0.5
    out = jax.block_until_ready(
        laplace_density(sdf, beta_param, beta=None, beta_min=beta_min))
    ref = _reference(sdf, beta_param, beta_min)
    assert out.shape == sdf.shape and out.dtype == jnp.float32
    assert jnp.max(jnp.abs(out - ref)) < 1e-3

    # Ragged shape: zero-copy path (full-extent lane block, no pad / slice).
    sdf2 = jax.random.normal(jax.random.PRNGKey(1), (7, 100), jnp.float32) * 0.5
    out2 = jax.block_until_ready(
        laplace_density(sdf2, beta_param, beta=None, beta_min=beta_min))
    ref2 = _reference(sdf2, beta_param, beta_min)
    assert out2.shape == sdf2.shape
    assert jnp.max(jnp.abs(out2 - ref2)) < 1e-3

    # beta-override path + bf16 input (output promoted to float32).
    sdf3 = (jax.random.normal(jax.random.PRNGKey(2), (4, 3, 128), jnp.float32)
            * 0.5).astype(jnp.bfloat16)
    out3 = jax.block_until_ready(
        laplace_density(sdf3, beta_param, beta=0.05, beta_min=beta_min))
    x3 = sdf3.astype(jnp.float32)
    ref3 = (1.0 / 0.05) * (0.5 + 0.5 * jnp.sign(x3) * jnp.expm1(-jnp.abs(x3) / 0.05))
    assert out3.shape == sdf3.shape and out3.dtype == jnp.float32
    assert jnp.max(jnp.abs(out3 - ref3)) < 2e-3

    print("KERNEL_OK")
</pallas_src>

<mosaic_0001>
module attributes {stable_mosaic.version = 11 : i64} {
  func.func @kernel(%arg0: i32, %arg1: memref<2xf32, #tpu.memory_space<smem>>, %arg2: memref<16x1024xf32, #tpu.memory_space<vmem>>, %arg3: memref<16x1024xf32, #tpu.memory_space<vmem>>) attributes {dimension_semantics = [#tpu.dimension_semantics<parallel>], iteration_bounds = array<i64: 1>, scalar_prefetch = 0 : i64, scratch_operands = 0 : i64, tpu.core_type = #tpu.core_type<tc>, window_params = [{transform_indices = @transform_0, window_bounds = array<i64: 2>}, {transform_indices = @transform_1, window_bounds = array<i64: 16, 1024>}, {transform_indices = @transform_2, window_bounds = array<i64: 16, 1024>}]} {
    %c0 = arith.constant 0 : index
    %0 = memref.load %arg1[%c0] : memref<2xf32, #tpu.memory_space<smem>>
    %c1 = arith.constant 1 : index
    %1 = memref.load %arg1[%c1] : memref<2xf32, #tpu.memory_space<smem>>
    %2 = math.absf %0 : f32
    %3 = arith.addf %2, %1 : f32
    %cst = arith.constant 1.000000e+00 : f32
    %4 = arith.divf %cst, %3 : f32
    %cst_0 = arith.constant 5.000000e-01 : f32
    %5 = arith.mulf %cst_0, %4 : f32
    %c0_1 = arith.constant 0 : index
    %c0_2 = arith.constant 0 : index
    %6 = vector.load %arg2[%c0_1, %c0_2] : memref<16x1024xf32, #tpu.memory_space<vmem>>, vector<16x1024xf32>
    %7 = math.absf %6 : vector<16x1024xf32>
    %cst_3 = arith.constant 0.000000e+00 : f32
    %8 = vector.broadcast %cst_3 : f32 to vector<16x1024xf32>
    %9 = arith.subf %8, %7 : vector<16x1024xf32>
    %10 = vector.broadcast %4 : f32 to vector<16x1024xf32>
    %11 = arith.mulf %9, %10 : vector<16x1024xf32>
    %12 = math.exp %11 : vector<16x1024xf32>
    %cst_4 = arith.constant 0.000000e+00 : f32
    %13 = vector.broadcast %cst_4 : f32 to vector<16x1024xf32>
    %14 = arith.cmpf oge, %6, %13 : vector<16x1024xf32>
    %15 = vector.broadcast %5 : f32 to vector<16x1024xf32>
    %16 = arith.mulf %15, %12 : vector<16x1024xf32>
    %17 = vector.broadcast %5 : f32 to vector<16x1024xf32>
    %18 = arith.mulf %17, %12 : vector<16x1024xf32>
    %19 = vector.broadcast %4 : f32 to vector<16x1024xf32>
    %20 = arith.subf %19, %18 : vector<16x1024xf32>
    %21 = arith.select %14, %16, %20 : vector<16x1024xi1>, vector<16x1024xf32>
    %c0_5 = arith.constant 0 : index
    %c0_6 = arith.constant 0 : index
    %22 = vector.load %arg3[%c0_5, %c0_6] : memref<16x1024xf32, #tpu.memory_space<vmem>>, vector<16x1024xf32>
    tpu.vector_store %arg3[%c0_5, %c0_6], %21 {strides = array<i32>} : memref<16x1024xf32, #tpu.memory_space<vmem>>, vector<16x1024xf32>,
    return
  }
  func.func @transform_0(%arg0: i32) -> i32 {
    %c0_i32 = arith.constant 0 : i32
    %c0_i32_0 = arith.constant 0 : i32
    return %c0_i32 : i32
  }
  func.func @transform_1(%arg0: i32) -> (i32, i32) {
    %c0_i32 = arith.constant 0 : i32
    %c0_i32_0 = arith.constant 0 : i32
    return %arg0, %c0_i32 : i32, i32
  }
  func.func @transform_2(%arg0: i32) -> (i32, i32) {
    %c0_i32 = arith.constant 0 : i32
    %c0_i32_0 = arith.constant 0 : i32
    return %arg0, %c0_i32 : i32, i32
  }
}

</mosaic_0001>

<llo_original>
// kernel: tpu_custom_call.1
$region0: #{tpu_custom_call.1}
  #allocation0 [shape = 'u32[]', space=smem, size = 0x4, offset = 0x4, fixed_abs, tag = 'smem constant byte address 0x4 - core index']
  #allocation1 [shape = 'u32[144,128]{1,0:T(1,128)}', space=vmem, size = 0x12000, scoped, tag = 'internal scratch']
  %s0 = inlined_call_operand.hbm [shape: f32[2], index: 0, kind: input, shape index: {}]
  %s1 = inlined_call_operand.hbm [shape: f32[16,1024], index: 1, kind: input, shape index: {}]
  %s2 = inlined_call_operand.hbm [shape: f32[16,1024], index: 2, kind: output, shape index: {}]
  %s3 = sld [smem:[#allocation0]]
  $region26: #{tpu_custom_call.1} parent=0
    _
  %s5 = ssub.s32 1, %s3
  %s6 = scalar_select 0, %s5, %s3
  $region1: #{tpu_custom_call.1} parent=0
    #allocation2 [shape = 'u8[512]{0}', space=smem, size = 0x200, scoped, tag = 'input window, operand 0, single buffered']
    #allocation3 [shape = 's32[1]{0}', space=sflag, size = 0x4, scoped, tag = 'scoped memory for tpu_custom_call.1']
    #allocation4 [shape = 's32[1]{0}', space=sflag, size = 0x4, scoped, tag = 'scoped memory for tpu_custom_call.1']
    #allocation5 [shape = 's32[1]{0}', space=sflag, size = 0x4, scoped, tag = 'scoped memory for tpu_custom_call.1']
    #allocation6 [shape = 'u8[65536]{0}', space=vmem, size = 0x10000, scoped, tag = 'input window, operand 1, single buffered']
    #allocation7 [shape = 'u8[65536]{0}', space=vmem, size = 0x10000, scoped, tag = 'output window, operand 0, single buffered']
    %7 = vsyncpa [#allocation5], 0
    %8 = vsyncpa [#allocation3], 0
    %9 = vsyncpa [#allocation4], 0
    // Predicated region
    $region2: #{tpu_custom_call.1} parent=1 // pred_check
      _
    $region3: #{tpu_custom_call.1} parent=1 // pred_check_branch
      %11 = sbr.rel (0) target = $region5
    $region4: #{tpu_custom_call.1} parent=1 // pred_region
      %s13 = ssub.s32 16, 16
      %14 = vsyncadd [#allocation5], %s13
      %17 = dma.hbm_to_smem %s0, 16, [#allocation2], [#allocation5]
    $region5: #{tpu_custom_call.1} parent=1 // pred_fallthru
      _
    // Predicated region
    $region6: #{tpu_custom_call.1} parent=1 // pred_check
      _
    $region7: #{tpu_custom_call.1} parent=1 // pred_check_branch
      %19 = sbr.rel (0) target = $region9
    $region8: #{tpu_custom_call.1} parent=1 // pred_region
      %s21 = ssub.s32 2048, 2048
      %22 = vsyncadd [#allocation3], %s21
      %s23 = sshll.u32 [#allocation6], 4
      %s24 = int_to_ptr.vmem [resolvable:$true] %s23
      %29 = dma.hbm_to_vmem [thread:$0]  %s1, 2048, %s24, [#allocation3], 1024, 1024, 64
    $region9: #{tpu_custom_call.1} parent=1 // pred_fallthru
      _
    // Predicated region
    $region10: #{tpu_custom_call.1} parent=1 // pred_check
      _
    $region11: #{tpu_custom_call.1} parent=1 // pred_check_branch
      %31 = sbr.rel (0) target = $region13
    $region12: #{tpu_custom_call.1} parent=1 // pred_region
      %32 = dma.done [#allocation5], 16
    $region13: #{tpu_custom_call.1} parent=1 // pred_fallthru
      _
    // Predicated region
    $region14: #{tpu_custom_call.1} parent=1 // pred_check
      _
    $region15: #{tpu_custom_call.1} parent=1 // pred_check_branch
      %34 = sbr.rel (0) target = $region17
    $region16: #{tpu_custom_call.1} parent=1 // pred_region
      %35 = dma.done [#allocation3], 2048
    $region17: #{tpu_custom_call.1} parent=1 // pred_fallthru
      _
    %36 = sfence
    %s37 = sld [smem:[#allocation2]]
    %s38 = sld [smem:[#allocation2 + $0x1]]
    %s39 = sand.u32 2147483647, %s37
    %s40 = sadd.f32 %s39, %s38
    %v41 = vstv %s40
    %v42 = vrcp.pop %v41
    %s43 = vtos %v42
    %s44 = smul.f32 %s43, 0.5
    %v45 = vld [vmem:[#allocation6] sm:$0xff]
    %v46 = vld [vmem:[#allocation6 + $0x8] sm:$0xff]
    %v47 = vld [vmem:[#allocation6 + $0x10] sm:$0xff]
    %v48 = vld [vmem:[#allocation6 + $0x18] sm:$0xff]
    %v49 = vld [vmem:[#allocation6 + $0x20] sm:$0xff]
    %v50 = vld [vmem:[#allocation6 + $0x28] sm:$0xff]
    %v51 = vld [vmem:[#allocation6 + $0x30] sm:$0xff]
    %v52 = vld [vmem:[#allocation6 + $0x38] sm:$0xff]
    %v53 = vld [vmem:[#allocation6 + $0x40] sm:$0xff]
    %v54 = vld [vmem:[#allocation6 + $0x48] sm:$0xff]
    %v55 = vld [vmem:[#allocation6 + $0x50] sm:$0xff]
    %v56 = vld [vmem:[#allocation6 + $0x58] sm:$0xff]
    %v57 = vld [vmem:[#allocation6 + $0x60] sm:$0xff]
    %v58 = vld [vmem:[#allocation6 + $0x68] sm:$0xff]
    %v59 = vld [vmem:[#allocation6 + $0x70] sm:$0xff]
    %v60 = vld [vmem:[#allocation6 + $0x78] sm:$0xff]
    %v61 = vand.u32 2147483647, %v45
    %v62 = vand.u32 2147483647, %v46
    %v63 = vand.u32 2147483647, %v47
    %v64 = vand.u32 2147483647, %v48
    %v65 = vand.u32 2147483647, %v49
    %v66 = vand.u32 2147483647, %v50
    %v67 = vand.u32 2147483647, %v51
    %v68 = vand.u32 2147483647, %v52
    %v69 = vand.u32 2147483647, %v53
    %v70 = vand.u32 2147483647, %v54
    %v71 = vand.u32 2147483647, %v55
    %v72 = vand.u32 2147483647, %v56
    %v73 = vand.u32 2147483647, %v57
    %v74 = vand.u32 2147483647, %v58
    %v75 = vand.u32 2147483647, %v59
    %v76 = vand.u32 2147483647, %v60
    %v77 = vsub.f32 0.0, %v61
    %v78 = vsub.f32 0.0, %v62
    %v79 = vsub.f32 0.0, %v63
    %v80 = vsub.f32 0.0, %v64
    %v81 = vsub.f32 0.0, %v65
    %v82 = vsub.f32 0.0, %v66
    %v83 = vsub.f32 0.0, %v67
    %v84 = vsub.f32 0.0, %v68
    %v85 = vsub.f32 0.0, %v69
    %v86 = vsub.f32 0.0, %v70
    %v87 = vsub.f32 0.0, %v71
    %v88 = vsub.f32 0.0, %v72
    %v89 = vsub.f32 0.0, %v73
    %v90 = vsub.f32 0.0, %v74
    %v91 = vsub.f32 0.0, %v75
    %v92 = vsub.f32 0.0, %v76
    %v93 = vstv %s43
    %v94 = vmul.f32 %v77, %v93
    %v95 = vmul.f32 %v78, %v93
    %v96 = vmul.f32 %v79, %v93
    %v97 = vmul.f32 %v80, %v93
    %v98 = vmul.f32 %v81, %v93
    %v99 = vmul.f32 %v82, %v93
    %v100 = vmul.f32 %v83, %v93
    %v101 = vmul.f32 %v84, %v93
    %v102 = vmul.f32 %v85, %v93
    %v103 = vmul.f32 %v86, %v93
    %v104 = vmul.f32 %v87, %v93
    %v105 = vmul.f32 %v88, %v93
    %v106 = vmul.f32 %v89, %v93
    %v107 = vmul.f32 %v90, %v93
    %v108 = vmul.f32 %v91, %v93
    %v109 = vmul.f32 %v92, %v93
    %v110 = vmul.f32 %v94, 1.442695
    %v111 = vpow.pop %v110
    %v112 = vmul.f32 %v95, 1.442695
    %v113 = vpow.pop %v112
    %v114 = vmul.f32 %v96, 1.442695
    %v115 = vpow.pop %v114
    %v116 = vmul.f32 %v97, 1.442695
    %v117 = vpow.pop %v116
    %v118 = vmul.f32 %v98, 1.442695
    %v119 = vpow.pop %v118
    %v120 = vmul.f32 %v99, 1.442695
    %v121 = vpow.pop %v120
    %v122 = vmul.f32 %v100, 1.442695
    %v123 = vpow.pop %v122
    %v124 = vmul.f32 %v101, 1.442695
    %v125 = vpow.pop %v124
    %v126 = vmul.f32 %v102, 1.442695
    %v127 = vpow.pop %v126
    %v128 = vmul.f32 %v103, 1.442695
    %v129 = vpow.pop %v128
    %v130 = vmul.f32 %v104, 1.442695
    %v131 = vpow.pop %v130
    %v132 = vmul.f32 %v105, 1.442695
    %v133 = vpow.pop %v132
    %v134 = vmul.f32 %v106, 1.442695
    %v135 = vpow.pop %v134
    %v136 = vmul.f32 %v107, 1.442695
    %v137 = vpow.pop %v136
    %v138 = vmul.f32 %v108, 1.442695
    %v139 = vpow.pop %v138
    %v140 = vmul.f32 %v109, 1.442695
    %v141 = vpow.pop %v140
    %vm142 = vcmp.ge.f32.partialorder %v45, 0.0
    %vm143 = vcmp.ge.f32.partialorder %v46, 0.0
    %vm144 = vcmp.ge.f32.partialorder %v47, 0.0
    %vm145 = vcmp.ge.f32.partialorder %v48, 0.0
    %vm146 = vcmp.ge.f32.partialorder %v49, 0.0
    %vm147 = vcmp.ge.f32.partialorder %v50, 0.0
    %vm148 = vcmp.ge.f32.partialorder %v51, 0.0
    %vm149 = vcmp.ge.f32.partialorder %v52, 0.0
    %vm150 = vcmp.ge.f32.partialorder %v53, 0.0
    %vm151 = vcmp.ge.f32.partialorder %v54, 0.0
    %vm152 = vcmp.ge.f32.partialorder %v55, 0.0
    %vm153 = vcmp.ge.f32.partialorder %v56, 0.0
    %vm154 = vcmp.ge.f32.partialorder %v57, 0.0
    %vm155 = vcmp.ge.f32.partialorder %v58, 0.0
    %vm156 = vcmp.ge.f32.partialorder %v59, 0.0
    %vm157 = vcmp.ge.f32.partialorder %v60, 0.0
    %v158 = vstv %s44
    %v159 = vmul.f32 %v158, %v111
    %v160 = vmul.f32 %v158, %v113
    %v161 = vmul.f32 %v158, %v115
    %v162 = vmul.f32 %v158, %v117
    %v163 = vmul.f32 %v158, %v119
    %v164 = vmul.f32 %v158, %v121
    %v165 = vmul.f32 %v158, %v123
    %v166 = vmul.f32 %v158, %v125
    %v167 = vmul.f32 %v158, %v127
    %v168 = vmul.f32 %v158, %v129
    %v169 = vmul.f32 %v158, %v131
    %v170 = vmul.f32 %v158, %v133
    %v171 = vmul.f32 %v158, %v135
    %v172 = vmul.f32 %v158, %v137
    %v173 = vmul.f32 %v158, %v139
    %v174 = vmul.f32 %v158, %v141
    %v175 = vsub.f32 %v93, %v159
    %v176 = vsub.f32 %v93, %v160
    %v177 = vsub.f32 %v93, %v161
    %v178 = vsub.f32 %v93, %v162
    %v179 = vsub.f32 %v93, %v163
    %v180 = vsub.f32 %v93, %v164
    %v181 = vsub.f32 %v93, %v165
    %v182 = vsub.f32 %v93, %v166
    %v183 = vsub.f32 %v93, %v167
    %v184 = vsub.f32 %v93, %v168
    %v185 = vsub.f32 %v93, %v169
    %v186 = vsub.f32 %v93, %v170
    %v187 = vsub.f32 %v93, %v171
    %v188 = vsub.f32 %v93, %v172
    %v189 = vsub.f32 %v93, %v173
    %v190 = vsub.f32 %v93, %v174
    %v191 = vsel %vm142, %v159, %v175
    %v192 = vsel %vm143, %v160, %v176
    %v193 = vsel %vm144, %v161, %v177
    %v194 = vsel %vm145, %v162, %v178
    %v195 = vsel %vm146, %v163, %v179
    %v196 = vsel %vm147, %v164, %v180
    %v197 = vsel %vm148, %v165, %v181
    %v198 = vsel %vm149, %v166, %v182
    %v199 = vsel %vm150, %v167, %v183
    %v200 = vsel %vm151, %v168, %v184
    %v201 = vsel %vm152, %v169, %v185
    %v202 = vsel %vm153, %v170, %v186
    %v203 = vsel %vm154, %v171, %v187
    %v204 = vsel %vm155, %v172, %v188
    %v205 = vsel %vm156, %v173, %v189
    %v206 = vsel %vm157, %v174, %v190
    %207 = vst [vmem:[#allocation7] sm:$0xff] %v191
    %208 = vst [vmem:[#allocation7 + $0x8] sm:$0xff] %v192
    %209 = vst [vmem:[#allocation7 + $0x10] sm:$0xff] %v193
    %210 = vst [vmem:[#allocation7 + $0x18] sm:$0xff] %v194
    %211 = vst [vmem:[#allocation7 + $0x20] sm:$0xff] %v195
    %212 = vst [vmem:[#allocation7 + $0x28] sm:$0xff] %v196
    %213 = vst [vmem:[#allocation7 + $0x30] sm:$0xff] %v197
    %214 = vst [vmem:[#allocation7 + $0x38] sm:$0xff] %v198
    %215 = vst [vmem:[#allocation7 + $0x40] sm:$0xff] %v199
    %216 = vst [vmem:[#allocation7 + $0x48] sm:$0xff] %v200
    %217 = vst [vmem:[#allocation7 + $0x50] sm:$0xff] %v201
    %218 = vst [vmem:[#allocation7 + $0x58] sm:$0xff] %v202
    %219 = vst [vmem:[#allocation7 + $0x60] sm:$0xff] %v203
    %220 = vst [vmem:[#allocation7 + $0x68] sm:$0xff] %v204
    %221 = vst [vmem:[#allocation7 + $0x70] sm:$0xff] %v205
    %222 = vst [vmem:[#allocation7 + $0x78] sm:$0xff] %v206
    // Predicated region
    $region18: #{tpu_custom_call.1} parent=1 // pred_check
      _
    $region19: #{tpu_custom_call.1} parent=1 // pred_check_branch
      %224 = sbr.rel (0) target = $region21
    $region20: #{tpu_custom_call.1} parent=1 // pred_region
      %s226 = ssub.s32 2048, 2048
      %227 = vsyncadd [#allocation4], %s226
      %s228 = sshll.u32 [#allocation7], 4
      %s229 = int_to_ptr.vmem [resolvable:$true] %s228
      %234 = dma.vmem_to_hbm [thread:$0]  %s229, 2048, %s2, [#allocation4], 1024, 1024, 64
    $region21: #{tpu_custom_call.1} parent=1 // pred_fallthru
      _
    // Predicated region
    $region22: #{tpu_custom_call.1} parent=1 // pred_check
      _
    $region23: #{tpu_custom_call.1} parent=1 // pred_check_branch
      %236 = sbr.rel (0) target = $region25
    $region24: #{tpu_custom_call.1} parent=1 // pred_region
      %237 = dma.done [#allocation4], 2048
    $region25: #{tpu_custom_call.1} parent=1 // pred_fallthru
      _
    %238 = vsyncpa [#allocation3], 1
    %239 = vsyncpa [#allocation4], 1
    %240 = vsyncpa [#allocation5], 1

</llo_original>
